<compile_context>
chip_gen: v5e
topology: v5e:2x2
jax: 0.10.0
libtpu: 0.0.40
codegen_flags: <defaults>
</compile_context>

<pallas_src>
import functools

import jax
import jax.numpy as jnp
from jax.experimental import pallas as pl
from jax.experimental.pallas import tpu as pltpu


def _round_up(x, m):
    return (x + m - 1) // m * m


def _mlp_fused_kernel(x_ref, *rest, n_layers, in_w0, din):
    """Fused MLP: y = act(... act([x, t] @ W0 + b0) @ W1 + b1 ...).

    x_ref : (TM, din) f32            concatenated [x, t] rows (unpadded columns)
    rest  : n_layers weight refs     (in_w_l, out_w_l) bf16, zero-padded, (in,out)
            n_layers bias refs       (1, out_w_l)      f32,  zero-padded
            output ref               (TM, out_w_last)  f32
            [optional] scratch ref   (TM, in_w0)       f32   (when din < in_w0)
    """
    w_refs = rest[:n_layers]
    b_refs = rest[n_layers:2 * n_layers]
    o_ref = rest[2 * n_layers]

    if in_w0 == din:
        y = x_ref[...]
    else:
        # Zero-extend the (TM, din) input to a lane-dense (TM, in_w0) slab in
        # VMEM scratch (masked store of the real columns, zeros elsewhere).
        pad_ref = rest[2 * n_layers + 1]
        pad_ref[...] = jnp.zeros_like(pad_ref)
        pad_ref[:, :din] = x_ref[...]
        y = pad_ref[...]

    for l in range(n_layers):                               # unrolled, static
        z = jnp.dot(y.astype(jnp.bfloat16), w_refs[l][...],  # bf16 MXU matmul
                    preferred_element_type=jnp.float32)      # f32 accumulate
        z = z + b_refs[l][...]                               # f32 epilogue
        # TODO(synk): config.model.act is unspecified in the reference; ReLU is
        # used deterministically (padded weight rows are zero, so the padding
        # math stays exact for any elementwise activation).
        y = jnp.maximum(z, 0.0)

    o_ref[...] = y.astype(o_ref.dtype)                       # single final cast


@functools.partial(jax.jit, static_argnames=("layer_dims",))
def _mlp_forward(x, t, weights, biases, *, layer_dims):
    B, D = x.shape
    din = layer_dims[0]                 # = D + 1 (t concatenated as last column)
    assert D == din - 1, (D, din)
    out_dim = layer_dims[-1]
    n_layers = len(weights)
    in_w0 = weights[0].shape[0]         # round_up(din, 128)
    out_w = weights[-1].shape[1]        # round_up(out_dim, 128)

    # Batch tile: TM=128 by default (both v7x TCs get work, ~40 live vregs);
    # TM=256 only when the grid still has >= 4 steps.
    b8 = _round_up(B, 8)
    tm = 256 if b8 >= 4 * 256 else min(128, b8)
    b_pad = _round_up(b8, tm)

    # Minimal wrapper materialization: the torch.cat([x, t[:, None]]) slab,
    # batch-padded only (no column padding -> kernel DMAs exactly din columns).
    t_vec = jnp.broadcast_to(jnp.ravel(jnp.asarray(t, jnp.float32)), (B,))
    x_cat = jnp.zeros((b_pad, din), jnp.float32)
    x_cat = x_cat.at[:B, :D].set(x.astype(jnp.float32))
    x_cat = x_cat.at[:B, D].set(t_vec)

    in_specs = [pl.BlockSpec((tm, din), lambda i: (i, 0))]           # activations
    for w in weights:                                                 # VMEM-resident
        in_specs.append(pl.BlockSpec(w.shape, lambda i: (0, 0)))
    for b in biases:
        in_specs.append(pl.BlockSpec(b.shape, lambda i: (0, 0)))

    scratch_shapes = []
    if in_w0 != din:
        scratch_shapes.append(pltpu.VMEM((tm, in_w0), jnp.float32))

    # VMEM budget: params (double-buffered worst case) + in/out streams +
    # activation headroom, clamped to stay inside v7x's 64 MiB physical VMEM.
    w_bytes = sum(w.size * w.dtype.itemsize for w in weights)
    b_bytes = sum(b.size * b.dtype.itemsize for b in biases)
    act_w = max(_round_up(d, 128) for d in layer_dims)
    vmem_est = (2 * (w_bytes + b_bytes)
                + 2 * tm * din * 4
                + 2 * tm * out_w * 4
                + 6 * tm * act_w * 4)
    vmem_limit = int(min(max(2 * vmem_est, 32 * 1024 * 1024), 56 * 1024 * 1024))

    kernel = functools.partial(_mlp_fused_kernel,
                               n_layers=n_layers, in_w0=in_w0, din=din)
    out = pl.pallas_call(
        kernel,
        out_shape=jax.ShapeDtypeStruct((b_pad, out_w), jnp.float32),
        grid=(b_pad // tm,),
        in_specs=in_specs,
        out_specs=pl.BlockSpec((tm, out_w), lambda i: (i, 0)),
        scratch_shapes=scratch_shapes,
        compiler_params=pltpu.CompilerParams(
            dimension_semantics=("parallel",),     # shard batch tiles across TCs
            vmem_limit_bytes=vmem_limit),
    )(x_cat, *weights, *biases)

    return out[:B, :out_dim]


class MLPPallas:
    """JAX/Pallas equivalent of the PyTorch MLP module (single fused kernel)."""

    def __init__(self, layers, key):
        self.layers = tuple(int(l) for l in layers)   # e.g. [in_dim+1, h, ..., out]
        weights, biases = [], []
        for in_ch, out_ch in zip(self.layers, self.layers[1:]):
            key, kw, kb = jax.random.split(key, 3)
            bound = 1.0 / float(in_ch) ** 0.5         # PyTorch default init range
            w = jax.random.uniform(kw, (out_ch, in_ch), jnp.float32, -bound, bound)
            b = jax.random.uniform(kb, (out_ch,), jnp.float32, -bound, bound)
            in_w, out_w = _round_up(in_ch, 128), _round_up(out_ch, 128)
            # pre-transpose to (in, out), zero-pad each layer independently
            w_pad = jnp.zeros((in_w, out_w), jnp.float32).at[:in_ch, :out_ch].set(w.T)
            b_pad = jnp.zeros((1, out_w), jnp.float32).at[0, :out_ch].set(b)
            weights.append(w_pad.astype(jnp.bfloat16))   # bf16 = native MXU dtype
            biases.append(b_pad)                         # bias stays f32
        self.weights = tuple(weights)
        self.biases = tuple(biases)

    def __call__(self, x, t):
        return _mlp_forward(x, t, self.weights, self.biases,
                            layer_dims=self.layers)


def _reference(x, t, layers, weights_bf16, biases):
    """Plain-JAX reference with the same (bf16-stored) parameters."""
    t_vec = jnp.broadcast_to(jnp.ravel(jnp.asarray(t, jnp.float32)), (x.shape[0],))
    y = jnp.concatenate([x.astype(jnp.float32), t_vec[:, None]], axis=-1)
    for (in_ch, out_ch), w, b in zip(zip(layers, layers[1:]), weights_bf16, biases):
        y = y @ w[:in_ch, :out_ch].astype(jnp.float32) + b[0, :out_ch]
        y = jnp.maximum(y, 0.0)
    return y


if __name__ == "__main__":
    key = jax.random.PRNGKey(0)
    k_x, k_p = jax.random.split(key, 2)

    B, D = 8, 8
    layers = [D + 1, 32, 32, 4]                       # config.model.layers

    x = jax.random.normal(k_x, (B, D), dtype=jnp.float32)
    t = jnp.float32(0.5)                              # scalar t (broadcast path)

    model = MLPPallas(layers, k_p)
    y = jax.block_until_ready(model(x, t))

    assert y.shape == (B, layers[-1]), y.shape
    assert jnp.all(jnp.isfinite(y))

    y_ref = _reference(x, t, layers, model.weights, model.biases)
    assert jnp.allclose(y, y_ref, atol=5e-2, rtol=5e-2), (
        float(jnp.max(jnp.abs(y - y_ref))))

    print("KERNEL_OK")
</pallas_src>

<mosaic_0001>
module attributes {stable_mosaic.version = 11 : i64} {
  func.func @_mlp_fused_kernel(%arg0: i32, %arg1: memref<8x9xf32, #tpu.memory_space<vmem>>, %arg2: memref<128x128xbf16, #tpu.memory_space<vmem>>, %arg3: memref<128x128xbf16, #tpu.memory_space<vmem>>, %arg4: memref<128x128xbf16, #tpu.memory_space<vmem>>, %arg5: memref<1x128xf32, #tpu.memory_space<vmem>>, %arg6: memref<1x128xf32, #tpu.memory_space<vmem>>, %arg7: memref<1x128xf32, #tpu.memory_space<vmem>>, %arg8: memref<8x128xf32, #tpu.memory_space<vmem>>, %arg9: memref<8x128xf32, #tpu.memory_space<vmem>>) attributes {dimension_semantics = [#tpu.dimension_semantics<parallel>], iteration_bounds = array<i64: 1>, scalar_prefetch = 0 : i64, scratch_operands = 1 : i64, tpu.core_type = #tpu.core_type<tc>, window_params = [{transform_indices = @transform_0, window_bounds = array<i64: 8, 9>}, {pipeline_mode = #tpu.pipeline_mode<synchronous>, transform_indices = @transform_1, window_bounds = array<i64: 128, 128>}, {pipeline_mode = #tpu.pipeline_mode<synchronous>, transform_indices = @transform_2, window_bounds = array<i64: 128, 128>}, {pipeline_mode = #tpu.pipeline_mode<synchronous>, transform_indices = @transform_3, window_bounds = array<i64: 128, 128>}, {pipeline_mode = #tpu.pipeline_mode<synchronous>, transform_indices = @transform_4, window_bounds = array<i64: 1, 128>}, {pipeline_mode = #tpu.pipeline_mode<synchronous>, transform_indices = @transform_5, window_bounds = array<i64: 1, 128>}, {pipeline_mode = #tpu.pipeline_mode<synchronous>, transform_indices = @transform_6, window_bounds = array<i64: 1, 128>}, {transform_indices = @transform_7, window_bounds = array<i64: 8, 128>}]} {
    %cst = arith.constant 0.000000e+00 : f32
    %0 = vector.broadcast %cst : f32 to vector<8x128xf32>
    %c0 = arith.constant 0 : index
    %c0_0 = arith.constant 0 : index
    %1 = vector.load %arg9[%c0, %c0_0] : memref<8x128xf32, #tpu.memory_space<vmem>>, vector<8x128xf32>
    tpu.vector_store %arg9[%c0, %c0_0], %0 {strides = array<i32>} : memref<8x128xf32, #tpu.memory_space<vmem>>, vector<8x128xf32>,
    %c0_1 = arith.constant 0 : index
    %c0_2 = arith.constant 0 : index
    %2 = vector.load %arg1[%c0_1, %c0_2] : memref<8x9xf32, #tpu.memory_space<vmem>>, vector<8x9xf32>
    %c0_3 = arith.constant 0 : index
    %c0_4 = arith.constant 0 : index
    %3 = vector.load %arg9[%c0_3, %c0_4] : memref<8x128xf32, #tpu.memory_space<vmem>>, vector<8x9xf32>
    tpu.vector_store %arg9[%c0_3, %c0_4], %2 {strides = array<i32>} : memref<8x128xf32, #tpu.memory_space<vmem>>, vector<8x9xf32>,
    %c0_5 = arith.constant 0 : index
    %c0_6 = arith.constant 0 : index
    %4 = vector.load %arg9[%c0_5, %c0_6] : memref<8x128xf32, #tpu.memory_space<vmem>>, vector<8x128xf32>
    %5 = arith.truncf %4 : vector<8x128xf32> to vector<8x128xbf16>
    %c0_7 = arith.constant 0 : index
    %c0_8 = arith.constant 0 : index
    %6 = vector.load %arg2[%c0_7, %c0_8] : memref<128x128xbf16, #tpu.memory_space<vmem>>, vector<128x128xbf16>
    %cst_9 = arith.constant dense<0.000000e+00> : vector<8x128xf32>
    %7 = tpu.matmul %5, %6, %cst_9 {dimension_numbers = #tpu.dot_dimension_numbers<[1], [0], [0], [1], [0, 0, 1, 1], [], []>} : vector<8x128xbf16>, vector<128x128xbf16>, vector<8x128xf32> -> vector<8x128xf32>
    %c0_10 = arith.constant 0 : index
    %c0_11 = arith.constant 0 : index
    %8 = vector.load %arg5[%c0_10, %c0_11] : memref<1x128xf32, #tpu.memory_space<vmem>>, vector<1x128xf32>
    %9 = vector.broadcast %8 : vector<1x128xf32> to vector<8x128xf32>
    %10 = arith.addf %7, %9 : vector<8x128xf32>
    %cst_12 = arith.constant 0.000000e+00 : f32
    %11 = vector.broadcast %cst_12 : f32 to vector<8x128xf32>
    %12 = arith.maximumf %10, %11 : vector<8x128xf32>
    %13 = arith.truncf %12 : vector<8x128xf32> to vector<8x128xbf16>
    %c0_13 = arith.constant 0 : index
    %c0_14 = arith.constant 0 : index
    %14 = vector.load %arg3[%c0_13, %c0_14] : memref<128x128xbf16, #tpu.memory_space<vmem>>, vector<128x128xbf16>
    %cst_15 = arith.constant dense<0.000000e+00> : vector<8x128xf32>
    %15 = tpu.matmul %13, %14, %cst_15 {dimension_numbers = #tpu.dot_dimension_numbers<[1], [0], [0], [1], [0, 0, 1, 1], [], []>} : vector<8x128xbf16>, vector<128x128xbf16>, vector<8x128xf32> -> vector<8x128xf32>
    %c0_16 = arith.constant 0 : index
    %c0_17 = arith.constant 0 : index
    %16 = vector.load %arg6[%c0_16, %c0_17] : memref<1x128xf32, #tpu.memory_space<vmem>>, vector<1x128xf32>
    %17 = vector.broadcast %16 : vector<1x128xf32> to vector<8x128xf32>
    %18 = arith.addf %15, %17 : vector<8x128xf32>
    %cst_18 = arith.constant 0.000000e+00 : f32
    %19 = vector.broadcast %cst_18 : f32 to vector<8x128xf32>
    %20 = arith.maximumf %18, %19 : vector<8x128xf32>
    %21 = arith.truncf %20 : vector<8x128xf32> to vector<8x128xbf16>
    %c0_19 = arith.constant 0 : index
    %c0_20 = arith.constant 0 : index
    %22 = vector.load %arg4[%c0_19, %c0_20] : memref<128x128xbf16, #tpu.memory_space<vmem>>, vector<128x128xbf16>
    %cst_21 = arith.constant dense<0.000000e+00> : vector<8x128xf32>
    %23 = tpu.matmul %21, %22, %cst_21 {dimension_numbers = #tpu.dot_dimension_numbers<[1], [0], [0], [1], [0, 0, 1, 1], [], []>} : vector<8x128xbf16>, vector<128x128xbf16>, vector<8x128xf32> -> vector<8x128xf32>
    %c0_22 = arith.constant 0 : index
    %c0_23 = arith.constant 0 : index
    %24 = vector.load %arg7[%c0_22, %c0_23] : memref<1x128xf32, #tpu.memory_space<vmem>>, vector<1x128xf32>
    %25 = vector.broadcast %24 : vector<1x128xf32> to vector<8x128xf32>
    %26 = arith.addf %23, %25 : vector<8x128xf32>
    %cst_24 = arith.constant 0.000000e+00 : f32
    %27 = vector.broadcast %cst_24 : f32 to vector<8x128xf32>
    %28 = arith.maximumf %26, %27 : vector<8x128xf32>
    %c0_25 = arith.constant 0 : index
    %c0_26 = arith.constant 0 : index
    %29 = vector.load %arg8[%c0_25, %c0_26] : memref<8x128xf32, #tpu.memory_space<vmem>>, vector<8x128xf32>
    tpu.vector_store %arg8[%c0_25, %c0_26], %28 {strides = array<i32>} : memref<8x128xf32, #tpu.memory_space<vmem>>, vector<8x128xf32>,
    return
  }
  func.func @transform_0(%arg0: i32) -> (i32, i32) {
    %c0_i32 = arith.constant 0 : i32
    %c0_i32_0 = arith.constant 0 : i32
    return %arg0, %c0_i32 : i32, i32
  }
  func.func @transform_1(%arg0: i32) -> (i32, i32) {
    %c0_i32 = arith.constant 0 : i32
    %c0_i32_0 = arith.constant 0 : i32
    %c0_i32_1 = arith.constant 0 : i32
    return %c0_i32, %c0_i32_0 : i32, i32
  }
  func.func @transform_2(%arg0: i32) -> (i32, i32) {
    %c0_i32 = arith.constant 0 : i32
    %c0_i32_0 = arith.constant 0 : i32
    %c0_i32_1 = arith.constant 0 : i32
    return %c0_i32, %c0_i32_0 : i32, i32
  }
  func.func @transform_3(%arg0: i32) -> (i32, i32) {
    %c0_i32 = arith.constant 0 : i32
    %c0_i32_0 = arith.constant 0 : i32
    %c0_i32_1 = arith.constant 0 : i32
    return %c0_i32, %c0_i32_0 : i32, i32
  }
  func.func @transform_4(%arg0: i32) -> (i32, i32) {
    %c0_i32 = arith.constant 0 : i32
    %c0_i32_0 = arith.constant 0 : i32
    %c0_i32_1 = arith.constant 0 : i32
    return %c0_i32, %c0_i32_0 : i32, i32
  }
  func.func @transform_5(%arg0: i32) -> (i32, i32) {
    %c0_i32 = arith.constant 0 : i32
    %c0_i32_0 = arith.constant 0 : i32
    %c0_i32_1 = arith.constant 0 : i32
    return %c0_i32, %c0_i32_0 : i32, i32
  }
  func.func @transform_6(%arg0: i32) -> (i32, i32) {
    %c0_i32 = arith.constant 0 : i32
    %c0_i32_0 = arith.constant 0 : i32
    %c0_i32_1 = arith.constant 0 : i32
    return %c0_i32, %c0_i32_0 : i32, i32
  }
  func.func @transform_7(%arg0: i32) -> (i32, i32) {
    %c0_i32 = arith.constant 0 : i32
    %c0_i32_0 = arith.constant 0 : i32
    return %arg0, %c0_i32 : i32, i32
  }
}

</mosaic_0001>

<llo_original>
// kernel: _mlp_forward.1
$region0: #{_mlp_forward.1}
  #allocation0 [shape = 'u32[]', space=smem, size = 0x4, offset = 0x4, fixed_abs, tag = 'smem constant byte address 0x4 - core index']
  #allocation1 [shape = 'u32[72,128]{1,0:T(1,128)}', space=vmem, size = 0x9000, scoped, tag = 'internal scratch']
  #allocation2 [shape = 'f32[8,128]{1,0:T(8,128)}', space=vmem, size = 0x1000, scoped, tag = 'scratch operand']
  %s0 = inlined_call_operand.vmem [shape: f32[8,9], index: 0, kind: input, shape index: {}]
  %s1 = inlined_call_operand.hbm [shape: bf16[128,128], index: 1, kind: input, shape index: {}]
  %s2 = inlined_call_operand.hbm [shape: bf16[128,128], index: 2, kind: input, shape index: {}]
  %s3 = inlined_call_operand.hbm [shape: bf16[128,128], index: 3, kind: input, shape index: {}]
  %s4 = inlined_call_operand.vmem [shape: f32[1,128], index: 4, kind: input, shape index: {}]
  %s5 = inlined_call_operand.vmem [shape: f32[1,128], index: 5, kind: input, shape index: {}]
  %s6 = inlined_call_operand.vmem [shape: f32[1,128], index: 6, kind: input, shape index: {}]
  %s7 = inlined_call_operand.vmem [shape: f32[8,128], index: 7, kind: output, shape index: {}]
  %s8 = sld [smem:[#allocation0]]
  $region50: #{_mlp_forward.1} parent=0
    _
  %s10 = ssub.s32 1, %s8
  %s11 = scalar_select 0, %s10, %s8
  $region1: #{_mlp_forward.1} parent=0
    #allocation3 [shape = 'u8[32768]{0}', space=vmem, size = 0x8000, scoped, tag = 'input window, operand 1, single buffered']
    #allocation4 [shape = 's32[1]{0}', space=sflag, size = 0x4, scoped, tag = 'scoped memory for _mlp_forward.1']
    #allocation5 [shape = 'u8[32768]{0}', space=vmem, size = 0x8000, scoped, tag = 'input window, operand 2, single buffered']
    #allocation6 [shape = 's32[1]{0}', space=sflag, size = 0x4, scoped, tag = 'scoped memory for _mlp_forward.1']
    #allocation7 [shape = 'u8[32768]{0}', space=vmem, size = 0x8000, scoped, tag = 'input window, operand 3, single buffered']
    %12 = vsyncpa [#allocation4], 0
    %13 = vsyncpa [#allocation6], 0
    // Predicated region
    $region2: #{_mlp_forward.1} parent=1 // pred_check
      _
    $region3: #{_mlp_forward.1} parent=1 // pred_check_branch
      %15 = sbr.rel (0) target = $region5
    $region4: #{_mlp_forward.1} parent=1 // pred_region
      _
    $region5: #{_mlp_forward.1} parent=1 // pred_fallthru
      _
    // Predicated region
    $region6: #{_mlp_forward.1} parent=1 // pred_check
      _
    $region7: #{_mlp_forward.1} parent=1 // pred_check_branch
      %17 = sbr.rel (0) target = $region9
    $region8: #{_mlp_forward.1} parent=1 // pred_region
      %19 = vsyncadd [#allocation4], 0
      %s20 = sshll.u32 %s1, 4
      %s21 = int_to_ptr.hbm [resolvable:$true] %s20
      %s22 = sshll.u32 [#allocation3], 4
      %s23 = int_to_ptr.vmem [resolvable:$true] %s22
      %28 = dma.hbm_to_vmem [thread:$0]  %s21, 1024, %s23, [#allocation4], 64, 64, 4
    $region9: #{_mlp_forward.1} parent=1 // pred_fallthru
      _
    // Predicated region
    $region10: #{_mlp_forward.1} parent=1 // pred_check
      _
    $region11: #{_mlp_forward.1} parent=1 // pred_check_branch
      %30 = sbr.rel (0) target = $region13
    $region12: #{_mlp_forward.1} parent=1 // pred_region
      %32 = vsyncadd [#allocation6], 0
      %s33 = sshll.u32 %s2, 4
      %s34 = int_to_ptr.hbm [resolvable:$true] %s33
      %s35 = sshll.u32 [#allocation5], 4
      %s36 = int_to_ptr.vmem [resolvable:$true] %s35
      %41 = dma.hbm_to_vmem [thread:$0]  %s34, 1024, %s36, [#allocation6], 64, 64, 4
    $region13: #{_mlp_forward.1} parent=1 // pred_fallthru
      _
    // Predicated region
    $region14: #{_mlp_forward.1} parent=1 // pred_check
      _
    $region15: #{_mlp_forward.1} parent=1 // pred_check_branch
      %43 = sbr.rel (0) target = $region17
    $region16: #{_mlp_forward.1} parent=1 // pred_region
      %45 = vsyncadd [#allocation6], 0
      %s46 = sshll.u32 %s3, 4
      %s47 = int_to_ptr.hbm [resolvable:$true] %s46
      %s48 = sshll.u32 [#allocation7], 4
      %s49 = int_to_ptr.vmem [resolvable:$true] %s48
      %54 = dma.hbm_to_vmem [thread:$0]  %s47, 1024, %s49, [#allocation6], 64, 64, 4
    $region17: #{_mlp_forward.1} parent=1 // pred_fallthru
      _
    // Predicated region
    $region18: #{_mlp_forward.1} parent=1 // pred_check
      _
    $region19: #{_mlp_forward.1} parent=1 // pred_check_branch
      %56 = sbr.rel (0) target = $region21
    $region20: #{_mlp_forward.1} parent=1 // pred_region
      _
    $region21: #{_mlp_forward.1} parent=1 // pred_fallthru
      _
    // Predicated region
    $region22: #{_mlp_forward.1} parent=1 // pred_check
      _
    $region23: #{_mlp_forward.1} parent=1 // pred_check_branch
      %58 = sbr.rel (0) target = $region25
    $region24: #{_mlp_forward.1} parent=1 // pred_region
      _
    $region25: #{_mlp_forward.1} parent=1 // pred_fallthru
      _
    // Predicated region
    $region26: #{_mlp_forward.1} parent=1 // pred_check
      _
    $region27: #{_mlp_forward.1} parent=1 // pred_check_branch
      %60 = sbr.rel (0) target = $region29
    $region28: #{_mlp_forward.1} parent=1 // pred_region
      _
    $region29: #{_mlp_forward.1} parent=1 // pred_fallthru
      _
    // Predicated region
    $region30: #{_mlp_forward.1} parent=1 // pred_check
      _
    $region31: #{_mlp_forward.1} parent=1 // pred_check_branch
      %62 = sbr.rel (0) target = $region33
    $region32: #{_mlp_forward.1} parent=1 // pred_region
      %64 = dma.done [#allocation4], 1024
    $region33: #{_mlp_forward.1} parent=1 // pred_fallthru
      _
    // Predicated region
    $region34: #{_mlp_forward.1} parent=1 // pred_check
      _
    $region35: #{_mlp_forward.1} parent=1 // pred_check_branch
      %66 = sbr.rel (0) target = $region37
    $region36: #{_mlp_forward.1} parent=1 // pred_region
      %68 = dma.done [#allocation6], 1024
    $region37: #{_mlp_forward.1} parent=1 // pred_fallthru
      _
    // Predicated region
    $region38: #{_mlp_forward.1} parent=1 // pred_check
      _
    $region39: #{_mlp_forward.1} parent=1 // pred_check_branch
      %70 = sbr.rel (0) target = $region41
    $region40: #{_mlp_forward.1} parent=1 // pred_region
      %72 = dma.done [#allocation6], 1024
    $region41: #{_mlp_forward.1} parent=1 // pred_fallthru
      _
    %73 = vst [vmem:[#allocation2] sm:$0xff] 0.0
    %v74 = vld [vmem:[%s0] sm:$0xff]
    %vm75 = vcmask 72704
    %76 = vst.msk [vmem:[#allocation2] sm:$0xff] %vm75, %v74
    %v77 = vld [vmem:[#allocation2] sm:$0xff]
    %v78 = vpack.c.bf16 %v77, %v77
    %v79 = vld [vmem:[#allocation3] sm:$0xf]
    %v80 = vld [vmem:[#allocation3 + $0x4] sm:$0xf]
    %v81 = vld [vmem:[#allocation3 + $0x8] sm:$0xf]
    %v82 = vld [vmem:[#allocation3 + $0xc] sm:$0xf]
    %v83 = vld [vmem:[#allocation3 + $0x10] sm:$0xf]
    %v84 = vld [vmem:[#allocation3 + $0x14] sm:$0xf]
    %v85 = vld [vmem:[#allocation3 + $0x18] sm:$0xf]
    %v86 = vld [vmem:[#allocation3 + $0x1c] sm:$0xf]
    %v87 = vld [vmem:[#allocation3 + $0x20] sm:$0xf]
    %v88 = vld [vmem:[#allocation3 + $0x24] sm:$0xf]
    %v89 = vld [vmem:[#allocation3 + $0x28] sm:$0xf]
    %v90 = vld [vmem:[#allocation3 + $0x2c] sm:$0xf]
    %v91 = vld [vmem:[#allocation3 + $0x30] sm:$0xf]
    %v92 = vld [vmem:[#allocation3 + $0x34] sm:$0xf]
    %v93 = vld [vmem:[#allocation3 + $0x38] sm:$0xf]
    %v94 = vld [vmem:[#allocation3 + $0x3c] sm:$0xf]
    %v95 = vld [vmem:[%s4] sm:$0x1]
    %v97 = vperm.slane %v95, 0
    %v115 = vunpack.c.l.b16 %v79
    %v116 = vunpack.c.l.b16 %v80
    %v117 = vunpack.c.l.b16 %v81
    %v118 = vunpack.c.l.b16 %v82
    %v119 = vunpack.c.l.b16 %v83
    %v120 = vunpack.c.l.b16 %v84
    %v121 = vunpack.c.l.b16 %v85
    %v122 = vunpack.c.l.b16 %v86
    %v123 = vunpack.c.l.b16 %v87
    %v124 = vunpack.c.l.b16 %v88
    %v125 = vunpack.c.l.b16 %v89
    %v126 = vunpack.c.l.b16 %v90
    %v127 = vunpack.c.l.b16 %v91
    %v128 = vunpack.c.l.b16 %v92
    %v129 = vunpack.c.l.b16 %v93
    %v130 = vunpack.c.l.b16 %v94
    %v131 = vpack.c.b16 %v116, %v115
    %v132 = vpack.c.b16 %v118, %v117
    %v133 = vpack.c.b16 %v120, %v119
    %v134 = vpack.c.b16 %v122, %v121
    %v135 = vpack.c.b16 %v124, %v123
    %v136 = vpack.c.b16 %v126, %v125
    %v137 = vpack.c.b16 %v128, %v127
    %v138 = vpack.c.b16 %v130, %v129
    %147 = vmatpush.bf16.msra.mxu0 %v138
    %148 = vmatpush.bf16.msra.mxu0 %v137
    %149 = vmatpush.bf16.msra.mxu0 %v136
    %150 = vmatpush.bf16.msra.mxu0 %v135
    %151 = vmatpush.bf16.msra.mxu0 %v134
    %152 = vmatpush.bf16.msra.mxu0 %v133
    %153 = vmatpush.bf16.msra.mxu0 %v132
    %154 = vmatpush.bf16.msra.mxu0 %v131
    %155 = vmatmul.bf16.gmra.mxu0 %v78
    %v156 = vpop.f32.mrf.mxu0
    %v157 = vadd.f32 %v97, %v156
    %v158 = vpop.f32.mrf.mxu0
    %159 = vdwg.mxu0
    %v160 = vmax.f32 %v157, 0.0
    %v161 = vpack.c.bf16 %v160, %v160
    %v162 = vld [vmem:[#allocation5] sm:$0xf]
    %v163 = vld [vmem:[#allocation5 + $0x4] sm:$0xf]
    %v164 = vld [vmem:[#allocation5 + $0x8] sm:$0xf]
    %v165 = vld [vmem:[#allocation5 + $0xc] sm:$0xf]
    %v166 = vld [vmem:[#allocation5 + $0x10] sm:$0xf]
    %v167 = vld [vmem:[#allocation5 + $0x14] sm:$0xf]
    %v168 = vld [vmem:[#allocation5 + $0x18] sm:$0xf]
    %v169 = vld [vmem:[#allocation5 + $0x1c] sm:$0xf]
    %v170 = vld [vmem:[#allocation5 + $0x20] sm:$0xf]
    %v171 = vld [vmem:[#allocation5 + $0x24] sm:$0xf]
    %v172 = vld [vmem:[#allocation5 + $0x28] sm:$0xf]
    %v173 = vld [vmem:[#allocation5 + $0x2c] sm:$0xf]
    %v174 = vld [vmem:[#allocation5 + $0x30] sm:$0xf]
    %v175 = vld [vmem:[#allocation5 + $0x34] sm:$0xf]
    %v176 = vld [vmem:[#allocation5 + $0x38] sm:$0xf]
    %v177 = vld [vmem:[#allocation5 + $0x3c] sm:$0xf]
    %v178 = vld [vmem:[%s5] sm:$0x1]
    %v180 = vperm.slane %v178, 0
    %v198 = vunpack.c.l.b16 %v162
    %v199 = vunpack.c.l.b16 %v163
    %v200 = vunpack.c.l.b16 %v164
    %v201 = vunpack.c.l.b16 %v165
    %v202 = vunpack.c.l.b16 %v166
    %v203 = vunpack.c.l.b16 %v167
    %v204 = vunpack.c.l.b16 %v168
    %v205 = vunpack.c.l.b16 %v169
    %v206 = vunpack.c.l.b16 %v170
    %v207 = vunpack.c.l.b16 %v171
    %v208 = vunpack.c.l.b16 %v172
    %v209 = vunpack.c.l.b16 %v173
    %v210 = vunpack.c.l.b16 %v174
    %v211 = vunpack.c.l.b16 %v175
    %v212 = vunpack.c.l.b16 %v176
    %v213 = vunpack.c.l.b16 %v177
    %v214 = vpack.c.b16 %v199, %v198
    %v215 = vpack.c.b16 %v201, %v200
    %v216 = vpack.c.b16 %v203, %v202
    %v217 = vpack.c.b16 %v205, %v204
    %v218 = vpack.c.b16 %v207, %v206
    %v219 = vpack.c.b16 %v209, %v208
    %v220 = vpack.c.b16 %v211, %v210
    %v221 = vpack.c.b16 %v213, %v212
    %230 = vmatpush.bf16.msra.mxu0 %v221
    %231 = vmatpush.bf16.msra.mxu0 %v220
    %232 = vmatpush.bf16.msra.mxu0 %v219
    %233 = vmatpush.bf16.msra.mxu0 %v218
    %234 = vmatpush.bf16.msra.mxu0 %v217
    %235 = vmatpush.bf16.msra.mxu0 %v216
    %236 = vmatpush.bf16.msra.mxu0 %v215
    %237 = vmatpush.bf16.msra.mxu0 %v214
    %238 = vmatmul.bf16.gmra.mxu0 %v161
    %v239 = vpop.f32.mrf.mxu0
    %v240 = vadd.f32 %v180, %v239
    %v241 = vpop.f32.mrf.mxu0
    %242 = vdwg.mxu0
    %v243 = vmax.f32 %v240, 0.0
    %v244 = vpack.c.bf16 %v243, %v243
    %v245 = vld [vmem:[#allocation7] sm:$0xf]
    %v246 = vld [vmem:[#allocation7 + $0x4] sm:$0xf]
    %v247 = vld [vmem:[#allocation7 + $0x8] sm:$0xf]
    %v248 = vld [vmem:[#allocation7 + $0xc] sm:$0xf]
    %v249 = vld [vmem:[#allocation7 + $0x10] sm:$0xf]
    %v250 = vld [vmem:[#allocation7 + $0x14] sm:$0xf]
    %v251 = vld [vmem:[#allocation7 + $0x18] sm:$0xf]
    %v252 = vld [vmem:[#allocation7 + $0x1c] sm:$0xf]
    %v253 = vld [vmem:[#allocation7 + $0x20] sm:$0xf]
    %v254 = vld [vmem:[#allocation7 + $0x24] sm:$0xf]
    %v255 = vld [vmem:[#allocation7 + $0x28] sm:$0xf]
    %v256 = vld [vmem:[#allocation7 + $0x2c] sm:$0xf]
    %v257 = vld [vmem:[#allocation7 + $0x30] sm:$0xf]
    %v258 = vld [vmem:[#allocation7 + $0x34] sm:$0xf]
    %v259 = vld [vmem:[#allocation7 + $0x38] sm:$0xf]
    %v260 = vld [vmem:[#allocation7 + $0x3c] sm:$0xf]
    %v261 = vld [vmem:[%s6] sm:$0x1]
    %v263 = vperm.slane %v261, 0
    %v281 = vunpack.c.l.b16 %v245
    %v282 = vunpack.c.l.b16 %v246
    %v283 = vunpack.c.l.b16 %v247
    %v284 = vunpack.c.l.b16 %v248
    %v285 = vunpack.c.l.b16 %v249
    %v286 = vunpack.c.l.b16 %v250
    %v287 = vunpack.c.l.b16 %v251
    %v288 = vunpack.c.l.b16 %v252
    %v289 = vunpack.c.l.b16 %v253
    %v290 = vunpack.c.l.b16 %v254
    %v291 = vunpack.c.l.b16 %v255
    %v292 = vunpack.c.l.b16 %v256
    %v293 = vunpack.c.l.b16 %v257
    %v294 = vunpack.c.l.b16 %v258
    %v295 = vunpack.c.l.b16 %v259
    %v296 = vunpack.c.l.b16 %v260
    %v297 = vpack.c.b16 %v282, %v281
    %v298 = vpack.c.b16 %v284, %v283
    %v299 = vpack.c.b16 %v286, %v285
    %v300 = vpack.c.b16 %v288, %v287
    %v301 = vpack.c.b16 %v290, %v289
    %v302 = vpack.c.b16 %v292, %v291
    %v303 = vpack.c.b16 %v294, %v293
    %v304 = vpack.c.b16 %v296, %v295
    %313 = vmatpush.bf16.msra.mxu0 %v304
    %314 = vmatpush.bf16.msra.mxu0 %v303
    %315 = vmatpush.bf16.msra.mxu0 %v302
    %316 = vmatpush.bf16.msra.mxu0 %v301
    %317 = vmatpush.bf16.msra.mxu0 %v300
    %318 = vmatpush.bf16.msra.mxu0 %v299
    %319 = vmatpush.bf16.msra.mxu0 %v298
    %320 = vmatpush.bf16.msra.mxu0 %v297
    %321 = vmatmul.bf16.gmra.mxu0 %v244
    %v322 = vpop.f32.mrf.mxu0
    %v323 = vadd.f32 %v263, %v322
    %v324 = vpop.f32.mrf.mxu0
    %325 = vdwg.mxu0
    %v326 = vmax.f32 %v323, 0.0
    %327 = vst [vmem:[%s7] sm:$0xff] %v326
    // Predicated region
    $region42: #{_mlp_forward.1} parent=1 // pred_check
      _
    $region43: #{_mlp_forward.1} parent=1 // pred_check_branch
      %329 = sbr.rel (0) target = $region45
    $region44: #{_mlp_forward.1} parent=1 // pred_region
      _
    $region45: #{_mlp_forward.1} parent=1 // pred_fallthru
      _
    // Predicated region
    $region46: #{_mlp_forward.1} parent=1 // pred_check
      _
    $region47: #{_mlp_forward.1} parent=1 // pred_check_branch
      %331 = sbr.rel (0) target = $region49
    $region48: #{_mlp_forward.1} parent=1 // pred_region
      _
    $region49: #{_mlp_forward.1} parent=1 // pred_fallthru
      _
    %332 = vsyncpa [#allocation4], 1
    %333 = vsyncpa [#allocation6], 1

</llo_original>
